<compile_context>
chip_gen: v6e
topology: v6e:2x2x1
jax: 0.10.0
libtpu: 0.0.40
codegen_flags: <defaults>
</compile_context>

<pallas_src>
import functools

import jax
import jax.numpy as jnp
from jax import lax
from jax.experimental import pallas as pl
from jax.experimental.pallas import tpu as pltpu

_EPS = 1e-8  # F.cosine_similarity eps


def _semantic_sim_loss_kernel(emb_r_ref, emb_c_ref, rowa_ref, onehot_ref,
                              out_ref, acc_ref, *, margin):
    """One (row-tile, col-tile) block of the pairwise loss; accumulates over columns."""
    j = pl.program_id(1)

    @pl.when(j == 0)
    def _():
        acc_ref[...] = jnp.zeros_like(acc_ref)

    xr = emb_r_ref[...]            # (tm, D) row embeddings, pre-normalized
    xc = emb_c_ref[...]            # (tn, D) col embeddings, pre-normalized

    # cosine similarity straight off the MXU: contract last dims of both operands
    # (no transpose / relayout of the column tile).
    cos = lax.dot_general(xr, xc, (((1,), (1,)), ((), ())),
                          preferred_element_type=jnp.float32)          # (tm, tn)
    d_emb = 1.0 - cos

    # d_cls[i, j] = Aij[labels[i], labels[j]], rebuilt from O(N*C) operands:
    #   rowa[i, c]   = Aij[labels[i], c]
    #   onehot[j, c] = (labels[j] == c)
    # Exact (one-hot entries are 0/1), and the tiny (tm,C)x(C,tn) matmul rides
    # the otherwise idle MXU slot.
    d_cls = lax.dot_general(rowa_ref[...], onehot_ref[...], (((1,), (1,)), ((), ())),
                            preferred_element_type=jnp.float32)        # (tm, tn)

    diff = d_emb - d_cls
    sigma = jnp.logical_and(d_cls < margin, d_emb < margin)
    acc_ref[...] += jnp.where(sigma, diff * diff, 0.0)                 # VPU-only per step

    @pl.when(j == pl.num_programs(1) - 1)
    def _():
        # Single cross-lane collapse per row block; broadcast the scalar into a
        # lane-dense (1, 8, 128) output tile (unmasked stores, megacore-safe).
        out_ref[...] = jnp.broadcast_to(jnp.sum(acc_ref[...]), out_ref.shape)


def _pick_tile(n, candidates=(256, 128, 64, 32, 16, 8)):
    """Largest MXU/VPU-friendly tile that divides n (full extent if n is small/odd)."""
    if n <= candidates[0]:
        return n                      # full-extent block dim is always legal
    for t in candidates:
        if n % t == 0:
            return t
    return n                          # fall back to full extent


def semantic_similarity_loss(all_embs, labels, Aij, margin=0.7, *, tm=None, tn=None):
    """Pallas implementation of SemanticSimilarityLoss.forward."""
    all_embs = all_embs.astype(jnp.float32)
    labels = labels.astype(jnp.int32)
    Aij = Aij.astype(jnp.float32)
    N, D = all_embs.shape
    C = Aij.shape[0]

    # Glue (O(N*D) / O(N*C), done once in plain JAX before the kernel):
    #  - pre-normalize embeddings with F.cosine_similarity's per-norm eps clamp
    #  - Aij rows for each sample's label + one-hot labels (replaces the N x N gather)
    norms = jnp.sqrt(jnp.sum(all_embs * all_embs, axis=-1, keepdims=True))
    embs_n = all_embs / jnp.maximum(norms, _EPS)                     # (N, D)
    rowa = Aij[labels]                                               # (N, C)
    onehot = jax.nn.one_hot(labels, C, dtype=jnp.float32)            # (N, C)

    # TODO(synk): optional bf16 cast of embs_n for 2x MXU throughput at large D
    # (kept f32 here: D is small, kernel is elementwise-bound, keeps exact parity).

    tm = _pick_tile(N) if tm is None else tm
    tn = _pick_tile(N) if tn is None else tn
    assert N % tm == 0 and N % tn == 0, "row/col tiles must divide N"
    n_rb, n_cb = N // tm, N // tn

    kernel = functools.partial(_semantic_sim_loss_kernel, margin=float(margin))

    partials = pl.pallas_call(
        kernel,
        out_shape=jax.ShapeDtypeStruct((n_rb, 8, 128), jnp.float32),
        grid_spec=pltpu.PrefetchScalarGridSpec(
            num_scalar_prefetch=0,
            grid=(n_rb, n_cb),                               # reduction (column) axis last
            in_specs=[
                pl.BlockSpec((tm, D), lambda i, j: (i, 0)),  # row embeddings
                pl.BlockSpec((tn, D), lambda i, j: (j, 0)),  # col embeddings
                pl.BlockSpec((tm, C), lambda i, j: (i, 0)),  # Aij rows for row labels
                pl.BlockSpec((tn, C), lambda i, j: (j, 0)),  # one-hot col labels
            ],
            out_specs=pl.BlockSpec((1, 8, 128), lambda i, j: (i, 0, 0)),
            scratch_shapes=[pltpu.VMEM((tm, tn), jnp.float32)],
        ),
        compiler_params=pltpu.CompilerParams(
            dimension_semantics=("parallel", "arbitrary")),  # rows across TCs on v7x
    )(embs_n, embs_n, rowa, onehot)

    # Tiny final reduction over row-block partial sums in plain JAX.
    return jnp.sum(partials[:, 0, 0]) / jnp.float32(N * N)


def _reference_loss(all_embs, labels, Aij, margin=0.7):
    """Pure-JAX reference mirroring the PyTorch forward (per-norm eps clamp)."""
    na = jnp.maximum(jnp.linalg.norm(all_embs, axis=-1), _EPS)
    cos = (all_embs @ all_embs.T) / (na[:, None] * na[None, :])
    d_emb = 1.0 - cos                               # (N, N)
    d_cls = Aij[labels[:, None], labels[None, :]]   # (N, N)
    sigma = jnp.logical_and(d_cls < margin, d_emb < margin).astype(jnp.float32)
    return jnp.mean(sigma * (d_emb - d_cls) ** 2)


if __name__ == "__main__":
    key = jax.random.PRNGKey(0)
    k1, k2 = jax.random.split(key)

    # Small case at module-typical shapes.
    N, D, C = 8, 32, 4
    all_embs = jax.random.normal(k1, (N, D), dtype=jnp.float32)
    labels = jax.random.randint(k2, (N,), 0, C, dtype=jnp.int32)
    ii = jnp.arange(C)
    Aij = (jnp.abs(ii[:, None] - ii[None, :]) / (C - 1)).astype(jnp.float32)

    loss = jax.block_until_ready(semantic_similarity_loss(all_embs, labels, Aij, margin=0.7))
    ref = _reference_loss(all_embs, labels, Aij, margin=0.7)
    assert jnp.allclose(loss, ref, atol=2e-5, rtol=1e-4), (loss, ref)

    # Slightly larger case exercising the 2-D tiling / multi-block accumulation path.
    k3, k4 = jax.random.split(k1)
    N2, D2, C2 = 256, 64, 10
    embs2 = jax.random.normal(k3, (N2, D2), dtype=jnp.float32)
    labels2 = jax.random.randint(k4, (N2,), 0, C2, dtype=jnp.int32)
    jj = jnp.arange(C2)
    Aij2 = (jnp.abs(jj[:, None] - jj[None, :]) / (C2 - 1)).astype(jnp.float32)

    loss2 = jax.block_until_ready(
        semantic_similarity_loss(embs2, labels2, Aij2, margin=0.7, tm=128, tn=128))
    ref2 = _reference_loss(embs2, labels2, Aij2, margin=0.7)
    assert jnp.allclose(loss2, ref2, atol=2e-5, rtol=1e-4), (loss2, ref2)

    print("KERNEL_OK")
</pallas_src>

<mosaic_0001>
module attributes {stable_mosaic.version = 11 : i64} {
  func.func @_semantic_sim_loss_kernel(%arg0: i32, %arg1: i32, %arg2: memref<8x32xf32, #tpu.memory_space<vmem>>, %arg3: memref<8x32xf32, #tpu.memory_space<vmem>>, %arg4: memref<8x4xf32, #tpu.memory_space<vmem>>, %arg5: memref<8x4xf32, #tpu.memory_space<vmem>>, %arg6: memref<1x8x128xf32, #tpu.memory_space<vmem>>, %arg7: memref<8x8xf32, #tpu.memory_space<vmem>>) attributes {dimension_semantics = [#tpu.dimension_semantics<parallel>, #tpu.dimension_semantics<arbitrary>], iteration_bounds = array<i64: 1, 1>, scalar_prefetch = 0 : i64, scratch_operands = 1 : i64, tpu.core_type = #tpu.core_type<tc>, window_params = [{transform_indices = @transform_0, window_bounds = array<i64: 8, 32>}, {transform_indices = @transform_1, window_bounds = array<i64: 8, 32>}, {transform_indices = @transform_2, window_bounds = array<i64: 8, 4>}, {transform_indices = @transform_3, window_bounds = array<i64: 8, 4>}, {transform_indices = @transform_4, window_bounds = array<i64: 1, 8, 128>}]} {
    %c0_i32 = arith.constant 0 : i32
    %0 = arith.cmpi eq, %arg1, %c0_i32 : i32
    %1 = arith.extui %0 : i1 to i32
    %c0_i32_0 = arith.constant 0 : i32
    %2 = arith.cmpi ne, %1, %c0_i32_0 : i32
    scf.if %2 {
      %cst_19 = arith.constant 0.000000e+00 : f32
      %26 = vector.broadcast %cst_19 : f32 to vector<8x8xf32>
      %c0_20 = arith.constant 0 : index
      %c0_21 = arith.constant 0 : index
      %27 = vector.load %arg7[%c0_20, %c0_21] : memref<8x8xf32, #tpu.memory_space<vmem>>, vector<8x8xf32>
      tpu.vector_store %arg7[%c0_20, %c0_21], %26 {strides = array<i32>} : memref<8x8xf32, #tpu.memory_space<vmem>>, vector<8x8xf32>,
    } else {
    }
    %c0 = arith.constant 0 : index
    %c0_1 = arith.constant 0 : index
    %3 = vector.load %arg2[%c0, %c0_1] : memref<8x32xf32, #tpu.memory_space<vmem>>, vector<8x32xf32>
    %c0_2 = arith.constant 0 : index
    %c0_3 = arith.constant 0 : index
    %4 = vector.load %arg3[%c0_2, %c0_3] : memref<8x32xf32, #tpu.memory_space<vmem>>, vector<8x32xf32>
    %cst = arith.constant dense<0.000000e+00> : vector<8x8xf32>
    %5 = tpu.matmul %3, %4, %cst {dimension_numbers = #tpu.dot_dimension_numbers<[1], [1], [0], [0], [0, 0, 1, 0], [], []>} : vector<8x32xf32>, vector<8x32xf32>, vector<8x8xf32> -> vector<8x8xf32>
    %cst_4 = arith.constant 1.000000e+00 : f32
    %6 = vector.broadcast %cst_4 : f32 to vector<8x8xf32>
    %7 = arith.subf %6, %5 : vector<8x8xf32>
    %c0_5 = arith.constant 0 : index
    %c0_6 = arith.constant 0 : index
    %8 = vector.load %arg4[%c0_5, %c0_6] : memref<8x4xf32, #tpu.memory_space<vmem>>, vector<8x4xf32>
    %c0_7 = arith.constant 0 : index
    %c0_8 = arith.constant 0 : index
    %9 = vector.load %arg5[%c0_7, %c0_8] : memref<8x4xf32, #tpu.memory_space<vmem>>, vector<8x4xf32>
    %cst_9 = arith.constant dense<0.000000e+00> : vector<8x8xf32>
    %10 = tpu.matmul %8, %9, %cst_9 {dimension_numbers = #tpu.dot_dimension_numbers<[1], [1], [0], [0], [0, 0, 1, 0], [], []>} : vector<8x4xf32>, vector<8x4xf32>, vector<8x8xf32> -> vector<8x8xf32>
    %11 = arith.subf %7, %10 : vector<8x8xf32>
    %cst_10 = arith.constant 0.699999988 : f32
    %12 = vector.broadcast %cst_10 : f32 to vector<8x8xf32>
    %13 = arith.cmpf olt, %10, %12 : vector<8x8xf32>
    %cst_11 = arith.constant 0.699999988 : f32
    %14 = vector.broadcast %cst_11 : f32 to vector<8x8xf32>
    %15 = arith.cmpf olt, %7, %14 : vector<8x8xf32>
    %16 = arith.andi %13, %15 : vector<8x8xi1>
    %c0_12 = arith.constant 0 : index
    %c0_13 = arith.constant 0 : index
    %17 = vector.load %arg7[%c0_12, %c0_13] : memref<8x8xf32, #tpu.memory_space<vmem>>, vector<8x8xf32>
    %18 = arith.mulf %11, %11 : vector<8x8xf32>
    %cst_14 = arith.constant 0.000000e+00 : f32
    %19 = vector.broadcast %cst_14 : f32 to vector<8x8xf32>
    %20 = arith.select %16, %18, %19 : vector<8x8xi1>, vector<8x8xf32>
    %21 = arith.addf %17, %20 : vector<8x8xf32>
    %c0_15 = arith.constant 0 : index
    %c0_16 = arith.constant 0 : index
    %22 = vector.load %arg7[%c0_15, %c0_16] : memref<8x8xf32, #tpu.memory_space<vmem>>, vector<8x8xf32>
    tpu.vector_store %arg7[%c0_15, %c0_16], %21 {strides = array<i32>} : memref<8x8xf32, #tpu.memory_space<vmem>>, vector<8x8xf32>,
    %c0_i32_17 = arith.constant 0 : i32
    %23 = arith.cmpi eq, %arg1, %c0_i32_17 : i32
    %24 = arith.extui %23 : i1 to i32
    %c0_i32_18 = arith.constant 0 : i32
    %25 = arith.cmpi ne, %24, %c0_i32_18 : i32
    scf.if %25 {
      %c0_19 = arith.constant 0 : index
      %c0_20 = arith.constant 0 : index
      %26 = vector.load %arg7[%c0_19, %c0_20] : memref<8x8xf32, #tpu.memory_space<vmem>>, vector<8x8xf32>
      %27 = vector.shape_cast %26 : vector<8x8xf32> to vector<1x8x8xf32>
      %cst_21 = arith.constant dense<0.000000e+00> : vector<1xf32>
      %28 = vector.multi_reduction <add>, %27, %cst_21 [1, 2] : vector<1x8x8xf32> to vector<1xf32>
      %29 = vector.shape_cast %28 : vector<1xf32> to vector<1x1x1xf32>
      %30 = vector.extract %29[0, 0, 0] : f32 from vector<1x1x1xf32>
      %31 = vector.broadcast %30 : f32 to vector<1x8x128xf32>
      %c0_22 = arith.constant 0 : index
      %c0_23 = arith.constant 0 : index
      %c0_24 = arith.constant 0 : index
      %32 = vector.load %arg6[%c0_22, %c0_23, %c0_24] : memref<1x8x128xf32, #tpu.memory_space<vmem>>, vector<1x8x128xf32>
      tpu.vector_store %arg6[%c0_22, %c0_23, %c0_24], %31 {strides = array<i32>} : memref<1x8x128xf32, #tpu.memory_space<vmem>>, vector<1x8x128xf32>,
    } else {
    }
    return
  }
  func.func @transform_0(%arg0: i32, %arg1: i32) -> (i32, i32) {
    %c0_i32 = arith.constant 0 : i32
    %c0_i32_0 = arith.constant 0 : i32
    return %arg0, %c0_i32 : i32, i32
  }
  func.func @transform_1(%arg0: i32, %arg1: i32) -> (i32, i32) {
    %c0_i32 = arith.constant 0 : i32
    %c0_i32_0 = arith.constant 0 : i32
    return %arg1, %c0_i32 : i32, i32
  }
  func.func @transform_2(%arg0: i32, %arg1: i32) -> (i32, i32) {
    %c0_i32 = arith.constant 0 : i32
    %c0_i32_0 = arith.constant 0 : i32
    return %arg0, %c0_i32 : i32, i32
  }
  func.func @transform_3(%arg0: i32, %arg1: i32) -> (i32, i32) {
    %c0_i32 = arith.constant 0 : i32
    %c0_i32_0 = arith.constant 0 : i32
    return %arg1, %c0_i32 : i32, i32
  }
  func.func @transform_4(%arg0: i32, %arg1: i32) -> (i32, i32, i32) {
    %c0_i32 = arith.constant 0 : i32
    %c0_i32_0 = arith.constant 0 : i32
    %c0_i32_1 = arith.constant 0 : i32
    return %arg0, %c0_i32, %c0_i32_0 : i32, i32, i32
  }
}

</mosaic_0001>

<llo_original>
// kernel: tpu_custom_call.1
$region0: #{tpu_custom_call.1}
  #allocation0 [shape = 'u32[]', space=smem, size = 0x4, offset = 0x4, fixed_abs, tag = 'smem constant byte address 0x4 - core index']
  #allocation1 [shape = 'u32[144,128]{1,0:T(1,128)}', space=vmem, size = 0x12000, scoped, tag = 'internal scratch']
  #allocation2 [shape = 'f32[8,8]{1,0:T(8,128)}', space=vmem, size = 0x1000, scoped, tag = 'scratch operand']
  %s0 = inlined_call_operand.vmem [shape: f32[8,32], index: 0, kind: input, shape index: {}]
  %s1 = inlined_call_operand.vmem [shape: f32[8,32], index: 1, kind: input, shape index: {}]
  %s2 = inlined_call_operand.vmem [shape: f32[8,4], index: 2, kind: input, shape index: {}]
  %s3 = inlined_call_operand.vmem [shape: f32[8,4], index: 3, kind: input, shape index: {}]
  %s4 = inlined_call_operand.hbm [shape: f32[1,8,128], index: 4, kind: output, shape index: {}]
  %s5 = sld [smem:[#allocation0]]
  $region34: #{tpu_custom_call.1} parent=0
    _
  %s7 = ssub.s32 1, %s5
  %s8 = scalar_select 0, %s7, %s5
  $region1: #{tpu_custom_call.1} parent=0
    #allocation3 [shape = 'u8[4096]{0}', space=vmem, size = 0x1000, scoped, tag = 'output window, operand 0, single buffered']
    #allocation4 [shape = 's32[1]{0}', space=sflag, size = 0x4, scoped, tag = 'scoped memory for tpu_custom_call.1']
    %9 = vsyncpa [#allocation4], 0
    // Predicated region
    $region2: #{tpu_custom_call.1} parent=1 // pred_check
      _
    $region3: #{tpu_custom_call.1} parent=1 // pred_check_branch
      %11 = sbr.rel (0) target = $region5
    $region4: #{tpu_custom_call.1} parent=1 // pred_region
      _
    $region5: #{tpu_custom_call.1} parent=1 // pred_fallthru
      _
    // Predicated region
    $region6: #{tpu_custom_call.1} parent=1 // pred_check
      _
    $region7: #{tpu_custom_call.1} parent=1 // pred_check_branch
      %13 = sbr.rel (0) target = $region9
    $region8: #{tpu_custom_call.1} parent=1 // pred_region
      _
    $region9: #{tpu_custom_call.1} parent=1 // pred_fallthru
      _
    // Predicated region
    $region10: #{tpu_custom_call.1} parent=1 // pred_check
      _
    $region11: #{tpu_custom_call.1} parent=1 // pred_check_branch
      %15 = sbr.rel (0) target = $region13
    $region12: #{tpu_custom_call.1} parent=1 // pred_region
      _
    $region13: #{tpu_custom_call.1} parent=1 // pred_fallthru
      _
    // Predicated region
    $region14: #{tpu_custom_call.1} parent=1 // pred_check
      _
    $region15: #{tpu_custom_call.1} parent=1 // pred_check_branch
      %17 = sbr.rel (0) target = $region17
    $region16: #{tpu_custom_call.1} parent=1 // pred_region
      _
    $region17: #{tpu_custom_call.1} parent=1 // pred_fallthru
      _
    %p18 = scmp.eq.s32.totalorder 0, 0
    // Predicated region
    $region18: #{tpu_custom_call.1} parent=1 // pred_check
      %p19 = pneg %p18
    $region19: #{tpu_custom_call.1} parent=1 // pred_check_branch
      %21 = sbr.rel (%p19) target = $region21
    $region20: #{tpu_custom_call.1} parent=1 // pred_region
      %vm22 = vcmask 64512
      %23 = vst.msk [vmem:[#allocation2] sm:$0xff] %vm22, 0.0
    $region21: #{tpu_custom_call.1} parent=1 // pred_fallthru
      _
    %v24 = vld [vmem:[%s0] sm:$0xff]
    %v25 = vld [vmem:[%s1] sm:$0xff]
    %vm26 = vcmask 261120
    %v28 = vsel %vm26, %v24, 0
    %v31 = vsel %vm26, %v25, 0
    %33 = vmatprep.subr.mxu0 0.0
    %34 = vmatpush1.xpose.msra.mxu0 0.0
    %35 = vmatprep.subr.mxu0 0.0
    %36 = vmatpush1.xpose.msra.mxu0 0.0
    %37 = vmatprep.subr.mxu0 0.0
    %38 = vmatpush1.xpose.msra.mxu0 0.0
    %39 = vmatprep.subr.mxu0 0.0
    %40 = vmatpush1.xpose.msra.mxu0 0.0
    %41 = vmatprep.subr.mxu0 0.0
    %42 = vmatpush1.xpose.msra.mxu0 0.0
    %43 = vmatprep.subr.mxu0 0.0
    %44 = vmatpush1.xpose.msra.mxu0 0.0
    %45 = vmatprep.subr.mxu0 0.0
    %46 = vmatpush1.xpose.msra.mxu0 0.0
    %47 = vmatprep.subr.mxu0 0.0
    %48 = vmatpush1.xpose.msra.mxu0 0.0
    %49 = vmatprep.subr.mxu0 0.0
    %50 = vmatpush1.xpose.msra.mxu0 0.0
    %51 = vmatprep.subr.mxu0 0.0
    %52 = vmatpush1.xpose.msra.mxu0 0.0
    %53 = vmatprep.subr.mxu0 0.0
    %54 = vmatpush1.xpose.msra.mxu0 0.0
    %55 = vmatprep.subr.mxu0 0.0
    %56 = vmatpush1.xpose.msra.mxu0 0.0
    %57 = vmatprep.subr.mxu0 0.0
    %58 = vmatpush1.xpose.msra.mxu0 0.0
    %59 = vmatprep.subr.mxu0 0.0
    %60 = vmatpush1.xpose.msra.mxu0 0.0
    %61 = vmatprep.subr.mxu0 0.0
    %62 = vmatpush1.xpose.msra.mxu0 0.0
    %63 = vmatprep.subr.mxu0 0.0
    %64 = vmatpush1.xpose.msra.mxu0 %v31
    %65 = vmatprep.subr.mxu0 0.0
    %66 = vmatpush2.xpose.msra.mxu0 0.0
    %67 = vmatprep.subr.mxu0 0.0
    %68 = vmatpush2.xpose.msra.mxu0 0.0
    %69 = vmatprep.subr.mxu0 0.0
    %70 = vmatpush2.xpose.msra.mxu0 0.0
    %71 = vmatprep.subr.mxu0 0.0
    %72 = vmatpush2.xpose.msra.mxu0 0.0
    %73 = vmatprep.subr.mxu0 0.0
    %74 = vmatpush2.xpose.msra.mxu0 0.0
    %75 = vmatprep.subr.mxu0 0.0
    %76 = vmatpush2.xpose.msra.mxu0 0.0
    %77 = vmatprep.subr.mxu0 0.0
    %78 = vmatpush2.xpose.msra.mxu0 0.0
    %79 = vmatprep.subr.mxu0 0.0
    %80 = vmatpush2.xpose.msra.mxu0 0.0
    %81 = vmatprep.subr.mxu0 0.0
    %82 = vmatpush2.xpose.msra.mxu0 0.0
    %83 = vmatprep.subr.mxu0 0.0
    %84 = vmatpush2.xpose.msra.mxu0 0.0
    %85 = vmatprep.subr.mxu0 0.0
    %86 = vmatpush2.xpose.msra.mxu0 0.0
    %87 = vmatprep.subr.mxu0 0.0
    %88 = vmatpush2.xpose.msra.mxu0 0.0
    %89 = vmatprep.subr.mxu0 0.0
    %90 = vmatpush2.xpose.msra.mxu0 0.0
    %91 = vmatprep.subr.mxu0 0.0
    %92 = vmatpush2.xpose.msra.mxu0 0.0
    %93 = vmatprep.subr.mxu0 0.0
    %94 = vmatpush2.xpose.msra.mxu0 0.0
    %95 = vmatprep.subr.mxu0 0.0
    %96 = vmatpush2.xpose.msra.mxu0 0.0
    %97 = vmatprep.mubr.f32.mxu0 0.0
    %98 = vmatmul.mubr.f32.gmra.mxu0 %v28
    %v99 = vpop.f32.mrf.mxu0
    %v100 = vadd.f32 0.0, %v99
    %v101 = vpop.f32.mrf.mxu0
    %102 = vdwg.mxu0
    %v103 = vsub.f32 1.0, %v100
    %v104 = vld [vmem:[%s2] sm:$0xff]
    %v105 = vld [vmem:[%s3] sm:$0xff]
    %vm106 = vcmask 31744
    %v108 = vsel %vm106, %v104, 0
    %v111 = vsel %vm106, %v105, 0
    %113 = vmatprep.subr.mxu0 0.0
    %114 = vmatpush1.xpose.msra.mxu0 0.0
    %115 = vmatprep.subr.mxu0 0.0
    %116 = vmatpush1.xpose.msra.mxu0 0.0
    %117 = vmatprep.subr.mxu0 0.0
    %118 = vmatpush1.xpose.msra.mxu0 0.0
    %119 = vmatprep.subr.mxu0 0.0
    %120 = vmatpush1.xpose.msra.mxu0 0.0
    %121 = vmatprep.subr.mxu0 0.0
    %122 = vmatpush1.xpose.msra.mxu0 0.0
    %123 = vmatprep.subr.mxu0 0.0
    %124 = vmatpush1.xpose.msra.mxu0 0.0
    %125 = vmatprep.subr.mxu0 0.0
    %126 = vmatpush1.xpose.msra.mxu0 0.0
    %127 = vmatprep.subr.mxu0 0.0
    %128 = vmatpush1.xpose.msra.mxu0 0.0
    %129 = vmatprep.subr.mxu0 0.0
    %130 = vmatpush1.xpose.msra.mxu0 0.0
    %131 = vmatprep.subr.mxu0 0.0
    %132 = vmatpush1.xpose.msra.mxu0 0.0
    %133 = vmatprep.subr.mxu0 0.0
    %134 = vmatpush1.xpose.msra.mxu0 0.0
    %135 = vmatprep.subr.mxu0 0.0
    %136 = vmatpush1.xpose.msra.mxu0 0.0
    %137 = vmatprep.subr.mxu0 0.0
    %138 = vmatpush1.xpose.msra.mxu0 0.0
    %139 = vmatprep.subr.mxu0 0.0
    %140 = vmatpush1.xpose.msra.mxu0 0.0
    %141 = vmatprep.subr.mxu0 0.0
    %142 = vmatpush1.xpose.msra.mxu0 0.0
    %143 = vmatprep.subr.mxu0 0.0
    %144 = vmatpush1.xpose.msra.mxu0 %v111
    %145 = vmatprep.subr.mxu0 0.0
    %146 = vmatpush2.xpose.msra.mxu0 0.0
    %147 = vmatprep.subr.mxu0 0.0
    %148 = vmatpush2.xpose.msra.mxu0 0.0
    %149 = vmatprep.subr.mxu0 0.0
    %150 = vmatpush2.xpose.msra.mxu0 0.0
    %151 = vmatprep.subr.mxu0 0.0
    %152 = vmatpush2.xpose.msra.mxu0 0.0
    %153 = vmatprep.subr.mxu0 0.0
    %154 = vmatpush2.xpose.msra.mxu0 0.0
    %155 = vmatprep.subr.mxu0 0.0
    %156 = vmatpush2.xpose.msra.mxu0 0.0
    %157 = vmatprep.subr.mxu0 0.0
    %158 = vmatpush2.xpose.msra.mxu0 0.0
    %159 = vmatprep.subr.mxu0 0.0
    %160 = vmatpush2.xpose.msra.mxu0 0.0
    %161 = vmatprep.subr.mxu0 0.0
    %162 = vmatpush2.xpose.msra.mxu0 0.0
    %163 = vmatprep.subr.mxu0 0.0
    %164 = vmatpush2.xpose.msra.mxu0 0.0
    %165 = vmatprep.subr.mxu0 0.0
    %166 = vmatpush2.xpose.msra.mxu0 0.0
    %167 = vmatprep.subr.mxu0 0.0
    %168 = vmatpush2.xpose.msra.mxu0 0.0
    %169 = vmatprep.subr.mxu0 0.0
    %170 = vmatpush2.xpose.msra.mxu0 0.0
    %171 = vmatprep.subr.mxu0 0.0
    %172 = vmatpush2.xpose.msra.mxu0 0.0
    %173 = vmatprep.subr.mxu0 0.0
    %174 = vmatpush2.xpose.msra.mxu0 0.0
    %175 = vmatprep.subr.mxu0 0.0
    %176 = vmatpush2.xpose.msra.mxu0 0.0
    %177 = vmatprep.mubr.f32.mxu0 0.0
    %178 = vmatmul.mubr.f32.gmra.mxu0 %v108
    %v179 = vpop.f32.mrf.mxu0
    %v180 = vadd.f32 0.0, %v179
    %v181 = vpop.f32.mrf.mxu0
    %182 = vdwg.mxu0
    %v183 = vsub.f32 %v103, %v180
    %vm184 = vcmp.lt.f32.partialorder %v180, 0.7
    %vm185 = vcmp.lt.f32.partialorder %v103, 0.7
    %vm186 = vmand %vm184, %vm185
    %v187 = vld [vmem:[#allocation2] sm:$0xff]
    %v188 = vmul.f32 %v183, %v183
    %v189 = vsel %vm186, %v188, 0.0
    %v190 = vadd.f32 %v187, %v189
    %vm191 = vcmask 64512
    %192 = vst.msk [vmem:[#allocation2] sm:$0xff] %vm191, %v190
    // Predicated region
    $region22: #{tpu_custom_call.1} parent=1 // pred_check
      %p193 = pneg %p18
    $region23: #{tpu_custom_call.1} parent=1 // pred_check_branch
      %195 = sbr.rel (%p193) target = $region25
    $region24: #{tpu_custom_call.1} parent=1 // pred_region
      %v196 = vld [vmem:[#allocation2] sm:$0xff]
      %v197 = vsel %vm191, %v196, 0.0
      %198 = vadd.xlane.f32.xlu0 %v197
      %v199 = vpop.xlane.xlu0 %198
      %v200 = vrot.slane %v199, 4
      %v201 = vadd.f32 %v199, %v200
      %v202 = vrot.slane %v201, 2
      %v203 = vadd.f32 %v201, %v202
      %v204 = vrot.slane %v203, 1
      %v205 = vadd.f32 %v203, %v204
      %s206 = vtos %v205
      %v207 = vstv %s206
      %208 = vst [vmem:[#allocation3] sm:$0xff] %v207
    $region25: #{tpu_custom_call.1} parent=1 // pred_fallthru
      _
    // Predicated region
    $region26: #{tpu_custom_call.1} parent=1 // pred_check
      _
    $region27: #{tpu_custom_call.1} parent=1 // pred_check_branch
      %210 = sbr.rel (0) target = $region29
    $region28: #{tpu_custom_call.1} parent=1 // pred_region
      %s212 = ssub.s32 128, 128
      %213 = vsyncadd [#allocation4], %s212
      %s215 = sshll.u32 [#allocation3], 4
      %s216 = int_to_ptr.vmem [resolvable:$true] %s215
      %218 = dma.vmem_to_hbm [thread:$0]  %s216, 128, %s4, [#allocation4]
    $region29: #{tpu_custom_call.1} parent=1 // pred_fallthru
      _
    // Predicated region
    $region30: #{tpu_custom_call.1} parent=1 // pred_check
      _
    $region31: #{tpu_custom_call.1} parent=1 // pred_check_branch
      %220 = sbr.rel (0) target = $region33
    $region32: #{tpu_custom_call.1} parent=1 // pred_region
      %221 = dma.done [#allocation4], 128
    $region33: #{tpu_custom_call.1} parent=1 // pred_fallthru
      _
    %222 = vsyncpa [#allocation4], 1

</llo_original>
